<compile_context>
chip_gen: v7x
topology: tpu7x:2x2x1
jax: 0.10.0
libtpu: 0.0.40
codegen_flags: <defaults>
</compile_context>

<pallas_src>
import functools
import math

import jax
import jax.numpy as jnp
import numpy as np
from jax.experimental import pallas as pl
from jax.experimental.pallas import tpu as pltpu


def _round_up(v, m):
    return (v + m - 1) // m * m


def _fremer_kernel(x_ref, comb_ref, bias_ref, mcorr_ref, out_ref, *, seq_len):
    x = x_ref[...]                                           # (S_pad, TN) f32

    # temporal mean over the true seq_len rows (padded rows are zero)
    t_mean = jnp.sum(x, axis=0, keepdims=True) * (1.0 / seq_len)   # (1, TN)

    # Single fused matmul: forward DFT (with T_Linear fold) composed with the
    # Hermitian inverse-DFT rows for the last pred_len steps.
    pred = jnp.dot(comb_ref[...], x, preferred_element_type=jnp.float32)

    # bias + temporal-mean correction:  C@(x - m) + m == C@x + (1 - C@1_S)*m
    out_ref[...] = pred + bias_ref[...] + mcorr_ref[...] * t_mean


def build_fremer_params(w_t, b_t, *, seq_len, pred_len):
    """Precompute the fused affine map (hoisted out of the per-call path)."""
    S, P = seq_len, pred_len
    L = S + P                       # total length fed to rfft
    F = L // 2 + 1                  # rfft bins
    n_out = 2 * (F - 1)             # irfft default output length (== L for even L)

    # Forward real-DFT basis with T_Linear (init_pred) and 1/L folds.
    t = jnp.arange(L, dtype=jnp.float32)
    k = jnp.arange(F, dtype=jnp.float32)
    ang = 2.0 * math.pi * k[:, None] * t[None, :] / L          # (F, L)
    dft_re = jnp.cos(ang)
    dft_im = -jnp.sin(ang)

    inv_l = 1.0 / float(L)
    m_re = (dft_re[:, :S] + dft_re[:, S:] @ w_t) * inv_l       # (F, S)
    m_im = (dft_im[:, :S] + dft_im[:, S:] @ w_t) * inv_l
    bias_re = (dft_re[:, S:] @ b_t) * inv_l                    # (F,)
    bias_im = (dft_im[:, S:] @ b_t) * inv_l

    # Inverse real-DFT rows for the last pred_len output steps, Hermitian
    # weights, the 1/n irfft factor and the `* n_freq` model rescale folded in.
    t_out = jnp.arange(n_out - P, n_out, dtype=jnp.float32)
    ang_i = 2.0 * math.pi * t_out[:, None] * k[None, :] / n_out  # (P, F)
    herm = jnp.full((F,), 2.0, dtype=jnp.float32)
    herm = herm.at[0].set(1.0)
    herm = herm.at[F - 1].set(1.0)
    scale = float(F) / float(n_out)
    idft_re = jnp.cos(ang_i) * herm[None, :] * scale           # (P, F)
    idft_im = -jnp.sin(ang_i) * herm[None, :] * scale

    # Full fusion (exact: everything between the DFTs is linear w/ identity
    # encoder).  low_cut has no effect on the output in this regime.
    combined = idft_re @ m_re + idft_im @ m_im                 # (P, S)
    bias_out = idft_re @ bias_re + idft_im @ bias_im           # (P,)
    mean_corr = 1.0 - jnp.sum(combined, axis=1)                # (P,)

    S_pad = _round_up(S, 8)
    P_pad = _round_up(P, 8)
    combined = jnp.pad(combined, ((0, P_pad - P), (0, S_pad - S)))
    bias_out = jnp.pad(bias_out, (0, P_pad - P)).reshape(P_pad, 1)
    mean_corr = jnp.pad(mean_corr, (0, P_pad - P)).reshape(P_pad, 1)
    return (combined.astype(jnp.float32), bias_out.astype(jnp.float32),
            mean_corr.astype(jnp.float32))


def fremer_forward(x, combined, bias_out, mean_corr, *, seq_len, pred_len):
    B, S, C = x.shape
    assert S == seq_len
    P = pred_len
    P_pad, S_pad = combined.shape

    # Lane tiling: pick a wide tile first (<=512) and pad N up to it; when
    # N > 128 make sure the parallel grid has >= 2 steps (v7x has 2 TCs).
    N = B * C
    if N <= 128:
        lane_tile = 128
    else:
        lane_tile = min(512, _round_up((N + 1) // 2, 128))
    N_pad = _round_up(N, lane_tile)

    # Fold batch into the lane dimension: (B, S, C) -> (S_pad, B*C padded).
    # TODO(synk): if the caller can supply x already in (S, B*C) layout this
    # transpose+pad HBM pass disappears entirely.
    x2d = jnp.transpose(x, (1, 0, 2)).reshape(S, N)
    x2d = jnp.pad(x2d, ((0, S_pad - S), (0, N_pad - N))).astype(jnp.float32)

    # Explicit VMEM budget: double-buffered x / out blocks + (tiny) resident
    # weights, clamped to 64 MiB so the same tiles fit v7x's physical VMEM.
    need = (2 * S_pad * lane_tile * 4 + 2 * P_pad * lane_tile * 4
            + 2 * (P_pad * S_pad + 2 * P_pad) * 4)
    vmem_limit = int(min(max(need + (4 << 20), 16 << 20), 64 << 20))

    kernel = functools.partial(_fremer_kernel, seq_len=S)

    out2d = pl.pallas_call(
        kernel,
        out_shape=jax.ShapeDtypeStruct((P_pad, N_pad), jnp.float32),
        grid_spec=pltpu.PrefetchScalarGridSpec(
            num_scalar_prefetch=0,
            grid=(N_pad // lane_tile,),
            in_specs=[
                pl.BlockSpec((S_pad, lane_tile), lambda j: (0, j)),   # x cols
                pl.BlockSpec((P_pad, S_pad), lambda j: (0, 0)),       # fused map
                pl.BlockSpec((P_pad, 1), lambda j: (0, 0)),           # bias
                pl.BlockSpec((P_pad, 1), lambda j: (0, 0)),           # mean corr
            ],
            out_specs=pl.BlockSpec((P_pad, lane_tile), lambda j: (0, j)),
        ),
        compiler_params=pltpu.CompilerParams(
            dimension_semantics=("parallel",),
            vmem_limit_bytes=vmem_limit),
    )(x2d, combined, bias_out, mean_corr)

    pred = out2d[:P, :N].reshape(P, B, C)
    return jnp.transpose(pred, (1, 0, 2))                      # (B, P, C)


def fremer_reference(x, w_t, b_t, *, pred_len, low_cut):
    """Pure-JAX reference mirroring the PyTorch forward (identity encoder)."""
    t_means = jnp.mean(x, axis=1)                              # (B, C)
    xc = x - t_means[:, None, :]
    init_pred = jnp.einsum('ps,bsc->bpc', w_t, xc) + b_t[None, :, None]
    x_total = jnp.concatenate([xc, init_pred], axis=1)         # (B, L, C)
    L = x_total.shape[1]
    freq = jnp.fft.rfft(x_total, axis=1) / L
    low_freq = freq[:, :low_cut, :]
    means = jnp.mean(freq, axis=1)
    freq_abs = jnp.abs(freq)
    stdev = jnp.sqrt(jnp.var(freq_abs, axis=1, keepdims=True, ddof=1))
    freqn = (freq - means[:, None, :]) / stdev
    freq_pred = freqn[:, low_cut:, :]                          # identity encoder
    freq_pred = freq_pred * stdev + means[:, None, :]
    freq_pred = jnp.concatenate([low_freq, freq_pred], axis=1)
    F = freq_pred.shape[1]
    freq_pred = freq_pred * F
    pred_seq = jnp.fft.irfft(freq_pred, axis=1)[:, -pred_len:]
    return pred_seq + t_means[:, None, :]


if __name__ == "__main__":
    # small config consistent with the module
    B, C = 2, 4
    seq_len, pred_len, low_cut = 16, 8, 2

    key = jax.random.PRNGKey(0)
    kx, kw, kb = jax.random.split(key, 3)
    x = jax.random.normal(kx, (B, seq_len, C), dtype=jnp.float32)

    # deterministic T_Linear parameters: nn.Linear(seq_len, pred_len)
    bound = 1.0 / math.sqrt(seq_len)
    w_t = jax.random.uniform(kw, (pred_len, seq_len), jnp.float32, -bound, bound)
    b_t = jax.random.uniform(kb, (pred_len,), jnp.float32, -bound, bound)

    # Basis construction is done once (hoisted out of the per-call path).
    combined, bias_out, mean_corr = build_fremer_params(
        w_t, b_t, seq_len=seq_len, pred_len=pred_len)

    out = fremer_forward(x, combined, bias_out, mean_corr,
                         seq_len=seq_len, pred_len=pred_len)
    out = jax.block_until_ready(out)

    ref = fremer_reference(x, w_t, b_t, pred_len=pred_len, low_cut=low_cut)
    np.testing.assert_allclose(np.asarray(out), np.asarray(ref),
                               rtol=5e-3, atol=5e-3)
    assert out.shape == (B, pred_len, C)
    print("KERNEL_OK")
</pallas_src>

<mosaic_0001>
module attributes {stable_mosaic.version = 11 : i64} {
  func.func @_fremer_kernel(%arg0: i32, %arg1: memref<16x128xf32, #tpu.memory_space<vmem>>, %arg2: memref<8x16xf32, #tpu.memory_space<vmem>>, %arg3: memref<8x1xf32, #tpu.memory_space<vmem>>, %arg4: memref<8x1xf32, #tpu.memory_space<vmem>>, %arg5: memref<8x128xf32, #tpu.memory_space<vmem>>) attributes {dimension_semantics = [#tpu.dimension_semantics<parallel>], iteration_bounds = array<i64: 1>, scalar_prefetch = 0 : i64, scratch_operands = 0 : i64, tpu.core_type = #tpu.core_type<tc>, window_params = [{transform_indices = @transform_0, window_bounds = array<i64: 16, 128>}, {pipeline_mode = #tpu.pipeline_mode<synchronous>, transform_indices = @transform_1, window_bounds = array<i64: 8, 16>}, {pipeline_mode = #tpu.pipeline_mode<synchronous>, transform_indices = @transform_2, window_bounds = array<i64: 8, 1>}, {pipeline_mode = #tpu.pipeline_mode<synchronous>, transform_indices = @transform_3, window_bounds = array<i64: 8, 1>}, {transform_indices = @transform_4, window_bounds = array<i64: 8, 128>}]} {
    %c0 = arith.constant 0 : index
    %c0_0 = arith.constant 0 : index
    %0 = vector.load %arg1[%c0, %c0_0] : memref<16x128xf32, #tpu.memory_space<vmem>>, vector<16x128xf32>
    %cst = arith.constant dense<0.000000e+00> : vector<128xf32>
    %1 = vector.multi_reduction <add>, %0, %cst [0] : vector<16x128xf32> to vector<128xf32>
    %2 = vector.shape_cast %1 : vector<128xf32> to vector<1x128xf32>
    %cst_1 = arith.constant 6.250000e-02 : f32
    %3 = vector.broadcast %cst_1 : f32 to vector<1x128xf32>
    %4 = arith.mulf %2, %3 : vector<1x128xf32>
    %c0_2 = arith.constant 0 : index
    %c0_3 = arith.constant 0 : index
    %5 = vector.load %arg2[%c0_2, %c0_3] : memref<8x16xf32, #tpu.memory_space<vmem>>, vector<8x16xf32>
    %cst_4 = arith.constant dense<0.000000e+00> : vector<8x128xf32>
    %6 = tpu.matmul %5, %0, %cst_4 {dimension_numbers = #tpu.dot_dimension_numbers<[1], [0], [0], [1], [0, 0, 1, 1], [], []>} : vector<8x16xf32>, vector<16x128xf32>, vector<8x128xf32> -> vector<8x128xf32>
    %c0_5 = arith.constant 0 : index
    %c0_6 = arith.constant 0 : index
    %7 = vector.load %arg3[%c0_5, %c0_6] : memref<8x1xf32, #tpu.memory_space<vmem>>, vector<8x1xf32>
    %8 = vector.broadcast %7 : vector<8x1xf32> to vector<8x128xf32>
    %9 = arith.addf %6, %8 : vector<8x128xf32>
    %c0_7 = arith.constant 0 : index
    %c0_8 = arith.constant 0 : index
    %10 = vector.load %arg4[%c0_7, %c0_8] : memref<8x1xf32, #tpu.memory_space<vmem>>, vector<8x1xf32>
    %11 = vector.broadcast %10 : vector<8x1xf32> to vector<8x128xf32>
    %12 = vector.broadcast %4 : vector<1x128xf32> to vector<8x128xf32>
    %13 = arith.mulf %11, %12 : vector<8x128xf32>
    %14 = arith.addf %9, %13 : vector<8x128xf32>
    %c0_9 = arith.constant 0 : index
    %c0_10 = arith.constant 0 : index
    %15 = vector.load %arg5[%c0_9, %c0_10] : memref<8x128xf32, #tpu.memory_space<vmem>>, vector<8x128xf32>
    tpu.vector_store %arg5[%c0_9, %c0_10], %14 {strides = array<i32>} : memref<8x128xf32, #tpu.memory_space<vmem>>, vector<8x128xf32>,
    return
  }
  func.func @transform_0(%arg0: i32) -> (i32, i32) {
    %c0_i32 = arith.constant 0 : i32
    %c0_i32_0 = arith.constant 0 : i32
    return %c0_i32, %arg0 : i32, i32
  }
  func.func @transform_1(%arg0: i32) -> (i32, i32) {
    %c0_i32 = arith.constant 0 : i32
    %c0_i32_0 = arith.constant 0 : i32
    %c0_i32_1 = arith.constant 0 : i32
    return %c0_i32, %c0_i32_0 : i32, i32
  }
  func.func @transform_2(%arg0: i32) -> (i32, i32) {
    %c0_i32 = arith.constant 0 : i32
    %c0_i32_0 = arith.constant 0 : i32
    %c0_i32_1 = arith.constant 0 : i32
    return %c0_i32, %c0_i32_0 : i32, i32
  }
  func.func @transform_3(%arg0: i32) -> (i32, i32) {
    %c0_i32 = arith.constant 0 : i32
    %c0_i32_0 = arith.constant 0 : i32
    %c0_i32_1 = arith.constant 0 : i32
    return %c0_i32, %c0_i32_0 : i32, i32
  }
  func.func @transform_4(%arg0: i32) -> (i32, i32) {
    %c0_i32 = arith.constant 0 : i32
    %c0_i32_0 = arith.constant 0 : i32
    return %c0_i32, %arg0 : i32, i32
  }
}

</mosaic_0001>

<llo_original>
// kernel: tpu_custom_call.1
$region0: #{tpu_custom_call.1}
  #allocation0 [shape = 'u32[]', space=smem, size = 0x4, offset = 0x4, fixed_abs, tag = 'smem constant byte address 0x4 - core index']
  #allocation1 [shape = 'u32[144,128]{1,0:T(1,128)}', space=vmem, size = 0x12000, scoped, tag = 'internal scratch']
  %s0 = inlined_call_operand.vmem [shape: f32[16,128], index: 0, kind: input, shape index: {}]
  %s1 = inlined_call_operand.hbm [shape: f32[8,16], index: 1, kind: input, shape index: {}]
  %s2 = inlined_call_operand.vmem [shape: f32[8,1], index: 2, kind: input, shape index: {}]
  %s3 = inlined_call_operand.vmem [shape: f32[8,1], index: 3, kind: input, shape index: {}]
  %s4 = inlined_call_operand.hbm [shape: f32[8,128], index: 4, kind: output, shape index: {}]
  %s5 = sld [smem:[#allocation0]]
  $region30: #{tpu_custom_call.1} parent=0
    _
  %s7 = ssub.s32 1, %s5
  %s8 = scalar_select 0, %s7, %s5
  $region1: #{tpu_custom_call.1} parent=0
    #allocation2 [shape = 'u8[4096]{0}', space=vmem, size = 0x1000, scoped, tag = 'input window, operand 1, single buffered']
    #allocation3 [shape = 's32[1]{0}', space=sflag, size = 0x4, scoped, tag = 'scoped memory for tpu_custom_call.1']
    #allocation4 [shape = 's32[1]{0}', space=sflag, size = 0x4, scoped, tag = 'scoped memory for tpu_custom_call.1']
    #allocation5 [shape = 'u8[4096]{0}', space=vmem, size = 0x1000, scoped, tag = 'output window, operand 0, single buffered']
    %9 = vsyncpa [#allocation3], 0
    %10 = vsyncpa [#allocation4], 0
    // Predicated region
    $region2: #{tpu_custom_call.1} parent=1 // pred_check
      _
    $region3: #{tpu_custom_call.1} parent=1 // pred_check_branch
      %12 = sbr.rel (0) target = $region5
    $region4: #{tpu_custom_call.1} parent=1 // pred_region
      _
    $region5: #{tpu_custom_call.1} parent=1 // pred_fallthru
      _
    // Predicated region
    $region6: #{tpu_custom_call.1} parent=1 // pred_check
      _
    $region7: #{tpu_custom_call.1} parent=1 // pred_check_branch
      %14 = sbr.rel (0) target = $region9
    $region8: #{tpu_custom_call.1} parent=1 // pred_region
      %s16 = ssub.s32 128, 128
      %17 = vsyncadd [#allocation3], %s16
      %s19 = sshll.u32 [#allocation2], 4
      %s20 = int_to_ptr.vmem [resolvable:$true] %s19
      %22 = dma.hbm_to_vmem [thread:$0]  %s1, 128, %s20, [#allocation3]
    $region9: #{tpu_custom_call.1} parent=1 // pred_fallthru
      _
    // Predicated region
    $region10: #{tpu_custom_call.1} parent=1 // pred_check
      _
    $region11: #{tpu_custom_call.1} parent=1 // pred_check_branch
      %24 = sbr.rel (0) target = $region13
    $region12: #{tpu_custom_call.1} parent=1 // pred_region
      _
    $region13: #{tpu_custom_call.1} parent=1 // pred_fallthru
      _
    // Predicated region
    $region14: #{tpu_custom_call.1} parent=1 // pred_check
      _
    $region15: #{tpu_custom_call.1} parent=1 // pred_check_branch
      %26 = sbr.rel (0) target = $region17
    $region16: #{tpu_custom_call.1} parent=1 // pred_region
      _
    $region17: #{tpu_custom_call.1} parent=1 // pred_fallthru
      _
    // Predicated region
    $region18: #{tpu_custom_call.1} parent=1 // pred_check
      _
    $region19: #{tpu_custom_call.1} parent=1 // pred_check_branch
      %28 = sbr.rel (0) target = $region21
    $region20: #{tpu_custom_call.1} parent=1 // pred_region
      %29 = dma.done [#allocation3], 128
    $region21: #{tpu_custom_call.1} parent=1 // pred_fallthru
      _
    %v30 = vld [vmem:[%s0] sm:$0xff]
    %v31 = vld [vmem:[%s0 + $0x8] sm:$0xff]
    %v32 = vadd.f32 %v30, %v31
    %v33 = vrot.slane %v32, 4
    %v34 = vadd.f32 %v32, %v33
    %v35 = vrot.slane %v34, 2
    %v36 = vadd.f32 %v34, %v35
    %v37 = vrot.slane %v36, 1
    %v38 = vadd.f32 %v36, %v37
    %v39 = vmul.f32 %v38, 0.0625
    %v40 = vld [vmem:[#allocation2] sm:$0xff]
    %v41 = vld [vmem:[%s2] sm:$0xff]
    %43 = vset.pattern.permute.xlu0 0
    %44 = vperm.xlu0 %43, %v41
    %v45 = vpop.permute.xlu0 %44
    %vm47 = vcmask 130048
    %v49 = vsel %vm47, %v40, 0
    %51 = vmatprep.subr.mxu0 0.0
    %52 = vmatpush1.msra.mxu0 %v30
    %53 = vmatprep.subr.mxu0 0.0
    %54 = vmatpush1.msra.mxu0 %v31
    %55 = vmatprep.subr.mxu0 0.0
    %56 = vmatpush1.msra.mxu0 0.0
    %57 = vmatprep.subr.mxu0 0.0
    %58 = vmatpush1.msra.mxu0 0.0
    %59 = vmatprep.subr.mxu0 0.0
    %60 = vmatpush1.msra.mxu0 0.0
    %61 = vmatprep.subr.mxu0 0.0
    %62 = vmatpush1.msra.mxu0 0.0
    %63 = vmatprep.subr.mxu0 0.0
    %64 = vmatpush1.msra.mxu0 0.0
    %65 = vmatprep.subr.mxu0 0.0
    %66 = vmatpush1.msra.mxu0 0.0
    %67 = vmatprep.subr.mxu0 0.0
    %68 = vmatpush1.msra.mxu0 0.0
    %69 = vmatprep.subr.mxu0 0.0
    %70 = vmatpush1.msra.mxu0 0.0
    %71 = vmatprep.subr.mxu0 0.0
    %72 = vmatpush1.msra.mxu0 0.0
    %73 = vmatprep.subr.mxu0 0.0
    %74 = vmatpush1.msra.mxu0 0.0
    %75 = vmatprep.subr.mxu0 0.0
    %76 = vmatpush1.msra.mxu0 0.0
    %77 = vmatprep.subr.mxu0 0.0
    %78 = vmatpush1.msra.mxu0 0.0
    %79 = vmatprep.subr.mxu0 0.0
    %80 = vmatpush1.msra.mxu0 0.0
    %81 = vmatprep.subr.mxu0 0.0
    %82 = vmatpush1.msra.mxu0 0.0
    %83 = vmatprep.subr.mxu0 0.0
    %84 = vmatpush1.msra.mxu0 0.0
    %85 = vmatprep.subr.mxu0 0.0
    %86 = vmatpush1.msra.mxu0 0.0
    %87 = vmatprep.subr.mxu0 0.0
    %88 = vmatpush1.msra.mxu0 0.0
    %89 = vmatprep.subr.mxu0 0.0
    %90 = vmatpush1.msra.mxu0 0.0
    %91 = vmatprep.subr.mxu0 0.0
    %92 = vmatpush1.msra.mxu0 0.0
    %93 = vmatprep.subr.mxu0 0.0
    %94 = vmatpush1.msra.mxu0 0.0
    %95 = vmatprep.subr.mxu0 0.0
    %96 = vmatpush1.msra.mxu0 0.0
    %97 = vmatprep.subr.mxu0 0.0
    %98 = vmatpush1.msra.mxu0 0.0
    %99 = vmatprep.subr.mxu0 0.0
    %100 = vmatpush1.msra.mxu0 0.0
    %101 = vmatprep.subr.mxu0 0.0
    %102 = vmatpush1.msra.mxu0 0.0
    %103 = vmatprep.subr.mxu0 0.0
    %104 = vmatpush1.msra.mxu0 0.0
    %105 = vmatprep.subr.mxu0 0.0
    %106 = vmatpush1.msra.mxu0 0.0
    %107 = vmatprep.subr.mxu0 0.0
    %108 = vmatpush1.msra.mxu0 0.0
    %109 = vmatprep.subr.mxu0 0.0
    %110 = vmatpush1.msra.mxu0 0.0
    %111 = vmatprep.subr.mxu0 0.0
    %112 = vmatpush1.msra.mxu0 0.0
    %113 = vmatprep.subr.mxu0 0.0
    %114 = vmatpush1.msra.mxu0 0.0
    %115 = vmatprep.mubr.f32.mxu0 0.0
    %116 = vmatmul.mubr.f32.gmra.mrb[0].mxu0 %v49
    %v117 = vpop.f32.mrb[0].mxu0
    %v118 = vadd.f32 %v45, %v117
    %v119 = vpop.f32.mrb[0].mxu0
    %120 = vdwg.mxu0
    %v121 = vld [vmem:[%s3] sm:$0xff]
    %123 = vset.pattern.permute.xlu0 0
    %124 = vperm.xlu0 %123, %v121
    %v125 = vpop.permute.xlu0 %124
    %v127 = vmul.f32 %v125, %v39
    %v128 = vadd.f32 %v118, %v127
    %129 = vst [vmem:[#allocation5] sm:$0xff] %v128
    // Predicated region
    $region22: #{tpu_custom_call.1} parent=1 // pred_check
      _
    $region23: #{tpu_custom_call.1} parent=1 // pred_check_branch
      %131 = sbr.rel (0) target = $region25
    $region24: #{tpu_custom_call.1} parent=1 // pred_region
      %s133 = ssub.s32 128, 128
      %134 = vsyncadd [#allocation4], %s133
      %s136 = sshll.u32 [#allocation5], 4
      %s137 = int_to_ptr.vmem [resolvable:$true] %s136
      %139 = dma.vmem_to_hbm [thread:$0]  %s137, 128, %s4, [#allocation4]
    $region25: #{tpu_custom_call.1} parent=1 // pred_fallthru
      _
    // Predicated region
    $region26: #{tpu_custom_call.1} parent=1 // pred_check
      _
    $region27: #{tpu_custom_call.1} parent=1 // pred_check_branch
      %141 = sbr.rel (0) target = $region29
    $region28: #{tpu_custom_call.1} parent=1 // pred_region
      %142 = dma.done [#allocation4], 128
    $region29: #{tpu_custom_call.1} parent=1 // pred_fallthru
      _
    %143 = vsyncpa [#allocation3], 1
    %144 = vsyncpa [#allocation4], 1

</llo_original>
